<compile_context>
chip_gen: v7x
topology: tpu7x:2x2x1
jax: 0.10.0
libtpu: 0.0.40
codegen_flags: <defaults>
</compile_context>

<pallas_src>
import functools

import jax
import jax.numpy as jnp
from jax.experimental import pallas as pl
from jax.experimental.pallas import tpu as pltpu

BN_EPS = 1e-5
ACT_DTYPE = jnp.bfloat16  # activation storage dtype between layers


# ----------------------------------------------------------------------------
# Pallas kernel: tiled matmul with fused per-output-channel affine (+ add, + ReLU)
# ----------------------------------------------------------------------------
def _round_up(x, m):
    return ((x + m - 1) // m) * m


def _pick_tile(dim, cap, align):
    """Return (tile, padded_dim): tile <= cap, multiple of `align`, divides padded."""
    d = _round_up(dim, align)
    if d <= cap:
        return d, d
    n = -(-d // cap)                      # number of tiles
    t = _round_up(-(-d // n), align)      # balanced tile size
    return t, t * n


def _mm_affine_kernel(a_ref, b_ref, s_ref, t_ref, *rest, relu, has_add):
    if has_add:
        r_ref, o_ref, acc_ref = rest
    else:
        o_ref, acc_ref = rest
        r_ref = None

    @pl.when(pl.program_id(2) == 0)
    def _():
        acc_ref[...] = jnp.zeros_like(acc_ref)

    acc_ref[...] += jnp.dot(a_ref[...], b_ref[...],
                            preferred_element_type=jnp.float32)

    @pl.when(pl.program_id(2) == pl.num_programs(2) - 1)
    def _():
        y = acc_ref[...] * s_ref[...] + t_ref[...]
        if has_add:
            y = y + r_ref[...].astype(jnp.float32)
        if relu:
            y = jnp.maximum(y, 0.0)
        o_ref[...] = y.astype(o_ref.dtype)


def matmul_affine(a, b, scale, shift, *, relu, add=None, out_dtype=ACT_DTYPE):
    """out = maybe_relu((a @ b) * scale + shift [+ add]); scale/shift broadcast over rows.

    A/B are fed to the MXU in bf16; accumulation and epilogue math stay in f32.
    """
    M, K = a.shape
    K2, N = b.shape
    assert K == K2
    tm, Mp = _pick_tile(M, 512, 16)    # 16-row alignment for bf16 sublane packing
    tk, Kp = _pick_tile(K, 512, 128)
    tn, Np = _pick_tile(N, 256, 128)
    # Expose >=2 parallel blocks for tiny deep-layer matmuls (v7x dual TensorCore).
    if Mp // tm == 1 and Np // tn == 1 and Np % 256 == 0:
        tn = Np // 2

    a_p = jnp.pad(a.astype(jnp.bfloat16), ((0, Mp - M), (0, Kp - K)))
    b_p = jnp.pad(b.astype(jnp.bfloat16), ((0, Kp - K), (0, Np - N)))
    s_p = jnp.pad(scale.astype(jnp.float32).reshape(1, -1), ((0, 0), (0, Np - N)))
    t_p = jnp.pad(shift.astype(jnp.float32).reshape(1, -1), ((0, 0), (0, Np - N)))

    inputs = [a_p, b_p, s_p, t_p]
    in_specs = [
        pl.BlockSpec((tm, tk), lambda i, j, k: (i, k)),
        pl.BlockSpec((tk, tn), lambda i, j, k: (k, j)),
        pl.BlockSpec((1, tn), lambda i, j, k: (0, j)),
        pl.BlockSpec((1, tn), lambda i, j, k: (0, j)),
    ]
    has_add = add is not None
    add_bytes = 0
    if has_add:
        r_p = jnp.pad(add, ((0, Mp - M), (0, Np - N)))
        inputs.append(r_p)
        in_specs.append(pl.BlockSpec((tm, tn), lambda i, j, k: (i, j)))
        add_bytes = Mp * Np * jnp.dtype(add.dtype).itemsize

    grid = (Mp // tm, Np // tn, Kp // tk)
    out_itemsize = jnp.dtype(out_dtype).itemsize
    cost = pl.CostEstimate(
        flops=2 * Mp * Np * Kp,
        transcendentals=0,
        bytes_accessed=Mp * Kp * 2 + Kp * Np * 2 + Mp * Np * out_itemsize + add_bytes,
    )

    out = pl.pallas_call(
        functools.partial(_mm_affine_kernel, relu=relu, has_add=has_add),
        out_shape=jax.ShapeDtypeStruct((Mp, Np), out_dtype),
        grid_spec=pltpu.PrefetchScalarGridSpec(
            num_scalar_prefetch=0,
            grid=grid,
            in_specs=in_specs,
            out_specs=pl.BlockSpec((tm, tn), lambda i, j, k: (i, j)),
            scratch_shapes=[pltpu.VMEM((tm, tn), jnp.float32)],
        ),
        compiler_params=pltpu.CompilerParams(
            dimension_semantics=("parallel", "parallel", "arbitrary"),
            vmem_limit_bytes=48 * 1024 * 1024,   # safe on v7x's 64 MiB VMEM
        ),
        cost_estimate=cost,
    )(*inputs)
    return out[:M, :N]


# ----------------------------------------------------------------------------
# Conv2d (as im2col + Pallas matmul), maxpool, nearest upsample
# ----------------------------------------------------------------------------
def _im2col(x, k, stride, pad):
    # x: (N, H, W, C) -> patches (N, Ho, Wo, k*k*C), tap ordering (kh, kw, cin)
    n, h, w, c = x.shape
    x = x.astype(ACT_DTYPE)
    xp = jnp.pad(x, ((0, 0), (pad, pad), (pad, pad), (0, 0)))
    ho = (h + 2 * pad - k) // stride + 1
    wo = (w + 2 * pad - k) // stride + 1
    cols = []
    for dy in range(k):            # k, stride, pad are static Python ints
        for dx in range(k):
            cols.append(xp[:, dy:dy + stride * (ho - 1) + 1:stride,
                           dx:dx + stride * (wo - 1) + 1:stride, :])
    patches = jnp.stack(cols, axis=3)  # (N, Ho, Wo, k*k, C)
    return patches.reshape(n, ho, wo, k * k * c), ho, wo


def conv2d_fused(x, w, scale, shift, stride, pad, relu, add=None, out_dtype=ACT_DTYPE):
    """x: (N,H,W,Cin); w: (k,k,Cin,Cout); scale/shift: (Cout,) applied post-matmul.
    `add` (optional, (N,Ho,Wo,Cout)) is fused into the epilogue before ReLU."""
    k = w.shape[0]
    n = x.shape[0]
    patches, ho, wo = _im2col(x, k, stride, pad)
    a = patches.reshape(n * ho * wo, -1)
    b = w.reshape(-1, w.shape[-1])
    add2 = None if add is None else add.reshape(n * ho * wo, w.shape[-1])
    out = matmul_affine(a, b, scale, shift, relu=relu, add=add2, out_dtype=out_dtype)
    return out.reshape(n, ho, wo, w.shape[-1])


def maxpool_3x3_s2_p1(x):
    n, h, w, c = x.shape
    xp = jnp.pad(x, ((0, 0), (1, 1), (1, 1), (0, 0)), constant_values=-jnp.inf)
    ho = (h + 2 - 3) // 2 + 1
    wo = (w + 2 - 3) // 2 + 1
    out = jnp.full((n, ho, wo, c), -jnp.inf, dtype=x.dtype)
    for dy in range(3):
        for dx in range(3):
            out = jnp.maximum(
                out, xp[:, dy:dy + 2 * (ho - 1) + 1:2, dx:dx + 2 * (wo - 1) + 1:2, :])
    return out


def upsample_nearest_2x(x):
    return jnp.repeat(jnp.repeat(x, 2, axis=1), 2, axis=2)


# ----------------------------------------------------------------------------
# Static architecture config + deterministic synthetic parameters
# ----------------------------------------------------------------------------
# (cin, cout, n_blocks, first_stride) for resnet34 layers 1..4
RESNET34_CFG = [(64, 64, 3, 1), (64, 128, 4, 2), (128, 256, 6, 2), (256, 512, 3, 2)]
DEC_IN = [512, 256, 128, 64, 32]
DEC_SKIP = [256, 128, 64, 64, 0]
DEC_OUT = [256, 128, 64, 32, 16]


def _conv_w(key, cin, cout, k):
    return jax.random.normal(key, (k, k, cin, cout), jnp.float32) * 0.05


def _bn(key, c):
    k1, k2, k3, k4 = jax.random.split(key, 4)
    gamma = 1.0 + 0.1 * jax.random.normal(k1, (c,), jnp.float32)
    beta = 0.1 * jax.random.normal(k2, (c,), jnp.float32)
    mean = 0.1 * jax.random.normal(k3, (c,), jnp.float32)
    var = 1.0 + 0.1 * jnp.abs(jax.random.normal(k4, (c,), jnp.float32))
    scale = gamma / jnp.sqrt(var + BN_EPS)
    shift = beta - mean * scale
    return scale, shift


def make_params(key, in_channels=3, classes=1):
    keys = iter(jax.random.split(key, 512))
    p = {}
    # encoder stage 0: conv1 7x7 s2 p3 (bias=False) + bn + relu
    p["conv1"] = _conv_w(next(keys), in_channels, 64, 7)
    p["bn1"] = _bn(next(keys), 64)
    layers = []
    for cin, cout, nblk, stride in RESNET34_CFG:
        blocks = []
        for b in range(nblk):
            s = stride if b == 0 else 1
            bcin = cin if b == 0 else cout
            blk = {
                "conv1": _conv_w(next(keys), bcin, cout, 3),
                "bn1": _bn(next(keys), cout),
                "conv2": _conv_w(next(keys), cout, cout, 3),
                "bn2": _bn(next(keys), cout),
            }
            if s != 1 or bcin != cout:
                blk["ds_conv"] = _conv_w(next(keys), bcin, cout, 1)
                blk["ds_bn"] = _bn(next(keys), cout)
            blocks.append(blk)   # NOTE: no python ints in the pytree (strides are static)
        layers.append(blocks)
    p["layers"] = layers
    decoders = []
    for cin, csk, cout in zip(DEC_IN, DEC_SKIP, DEC_OUT):
        c1_in = cin + csk
        d = {
            "w1": _conv_w(next(keys), c1_in, cout, 3),
            "b1": 0.05 * jax.random.normal(next(keys), (cout,), jnp.float32),
            "bn1": _bn(next(keys), cout),
            "w2": _conv_w(next(keys), cout, cout, 3),
            "b2": 0.05 * jax.random.normal(next(keys), (cout,), jnp.float32),
            "bn2": _bn(next(keys), cout),
        }
        decoders.append(d)
    p["decoder"] = decoders
    # head: conv 3x3 pad 1, with bias, no bn/relu
    p["head_w"] = _conv_w(next(keys), DEC_OUT[-1], classes, 3)
    p["head_b"] = 0.05 * jax.random.normal(next(keys), (classes,), jnp.float32)
    return p


# ----------------------------------------------------------------------------
# Model blocks
# ----------------------------------------------------------------------------
def _conv_bn(x, w, bn, stride, pad, relu, bias=None, add=None, out_dtype=ACT_DTYPE):
    scale, shift = bn
    if bias is not None:
        # reference applies Conv2d (bias=True in decoder) then BatchNorm:
        # BN(conv + bias) = scale*conv + (shift + scale*bias)
        shift = shift + scale * bias
    return conv2d_fused(x, w, scale, shift, stride, pad, relu,
                        add=add, out_dtype=out_dtype)


def basic_block(x, blk, stride):
    if "ds_conv" in blk:
        identity = _conv_bn(x, blk["ds_conv"], blk["ds_bn"],
                            stride=stride, pad=0, relu=False)
    else:
        identity = x
    out = _conv_bn(x, blk["conv1"], blk["bn1"], stride=stride, pad=1, relu=True)
    # second conv: BN + residual add + final ReLU fused into the matmul epilogue
    out = _conv_bn(out, blk["conv2"], blk["bn2"], stride=1, pad=1, relu=True,
                   add=identity)
    return out


def decoder_block(x, skip, d):
    x = upsample_nearest_2x(x)
    if skip is not None:
        x = jnp.concatenate([x, skip], axis=-1)
    x = _conv_bn(x, d["w1"], d["bn1"], stride=1, pad=1, relu=True, bias=d["b1"])
    x = _conv_bn(x, d["w2"], d["bn2"], stride=1, pad=1, relu=True, bias=d["b2"])
    return x


def unet_forward(x_nchw, p):
    x = jnp.transpose(x_nchw, (0, 2, 3, 1)).astype(jnp.float32)  # NCHW -> NHWC
    feats = []
    # encoder stage 0
    x = _conv_bn(x, p["conv1"], p["bn1"], stride=2, pad=3, relu=True)
    feats.append(x)
    # encoder stage 1: maxpool + layer1; stages 2..4: layers 2..4
    x = maxpool_3x3_s2_p1(x)
    for li, (_, _, _, first_stride) in enumerate(RESNET34_CFG):
        for b, blk in enumerate(p["layers"][li]):
            s = first_stride if b == 0 else 1   # static python int
            x = basic_block(x, blk, s)
        feats.append(x)
    skips = feats[:-1][::-1]
    for i, d in enumerate(p["decoder"]):
        skip = skips[i] if i < len(skips) else None
        x = decoder_block(x, skip, d)
    # head (no bn, no relu), stored in f32
    classes = p["head_w"].shape[-1]
    x = conv2d_fused(x, p["head_w"], jnp.ones((classes,), jnp.float32),
                     p["head_b"], stride=1, pad=1, relu=False,
                     out_dtype=jnp.float32)
    return jnp.transpose(x, (0, 3, 1, 2))  # NHWC -> NCHW


# ----------------------------------------------------------------------------
if __name__ == "__main__":
    root = jax.random.PRNGKey(0)
    k_x, k_p, k_a, k_b, k_s, k_t, k_r, k_cx, k_cw = jax.random.split(root, 9)

    # sanity check the fused Pallas matmul (bf16 MXU path) against plain JAX
    a = jax.random.normal(k_a, (40, 37), jnp.float32)
    b = jax.random.normal(k_b, (37, 19), jnp.float32)
    sc = jax.random.normal(k_s, (19,), jnp.float32)
    sh = jax.random.normal(k_t, (19,), jnp.float32)
    got = matmul_affine(a, b, sc, sh, relu=True, out_dtype=jnp.float32)
    ref_dot = jnp.dot(a.astype(jnp.bfloat16), b.astype(jnp.bfloat16),
                      preferred_element_type=jnp.float32)
    ref = jnp.maximum(ref_dot * sc + sh, 0.0)
    assert jnp.allclose(got, ref, atol=2e-3, rtol=2e-3), "matmul kernel mismatch"

    # sanity check the fused residual-add epilogue
    radd = jax.random.normal(k_r, (40, 19), jnp.float32)
    got2 = matmul_affine(a, b, sc, sh, relu=True, add=radd, out_dtype=jnp.float32)
    ref2 = jnp.maximum(ref_dot * sc + sh + radd, 0.0)
    assert jnp.allclose(got2, ref2, atol=2e-3, rtol=2e-3), "fused-add mismatch"

    # sanity check conv lowering against lax.conv (bf16 operands, f32 accum)
    cx = jax.random.normal(k_cx, (1, 5, 5, 3), jnp.float32)
    cw = jax.random.normal(k_cw, (3, 3, 3, 4), jnp.float32)
    got_c = conv2d_fused(cx, cw, jnp.ones((4,)), jnp.zeros((4,)), 1, 1, False,
                         out_dtype=jnp.float32)
    ref_c = jax.lax.conv_general_dilated(
        cx.astype(jnp.bfloat16), cw.astype(jnp.bfloat16), (1, 1), ((1, 1), (1, 1)),
        dimension_numbers=("NHWC", "HWIO", "NHWC"),
        preferred_element_type=jnp.float32)
    assert jnp.allclose(got_c, ref_c, atol=1e-2, rtol=1e-2), "conv lowering mismatch"

    # full Unet forward (64x64 is the smallest clean multiple of the /32 downsampling)
    params = make_params(k_p, in_channels=3, classes=1)
    x = jax.random.normal(k_x, (2, 3, 64, 64), jnp.float32)  # NCHW, like PyTorch

    fwd = jax.jit(unet_forward)
    y = fwd(x, params)
    y = jax.block_until_ready(y)
    assert y.shape == (2, 1, 64, 64), y.shape
    assert jnp.all(jnp.isfinite(y))
    # TODO(synk): BatchNorm is reproduced in eval mode (running stats folded into the
    # kernel's affine); training-mode batch statistics are not emulated.
    print("KERNEL_OK")
</pallas_src>

<mosaic_0001>
module attributes {stable_mosaic.version = 11 : i64} {
  func.func @_mm_affine_kernel(%arg0: i32, %arg1: i32, %arg2: i32, %arg3: memref<48x128xbf16, #tpu.memory_space<vmem>>, %arg4: memref<128x128xbf16, #tpu.memory_space<vmem>>, %arg5: memref<1x128xf32, #tpu.memory_space<vmem>>, %arg6: memref<1x128xf32, #tpu.memory_space<vmem>>, %arg7: memref<48x128xf32, #tpu.memory_space<vmem>>, %arg8: memref<48x128xf32, #tpu.memory_space<vmem>>) attributes {dimension_semantics = [#tpu.dimension_semantics<parallel>, #tpu.dimension_semantics<parallel>, #tpu.dimension_semantics<arbitrary>], iteration_bounds = array<i64: 1, 1, 1>, scalar_prefetch = 0 : i64, scratch_operands = 1 : i64, tpu.core_type = #tpu.core_type<tc>, window_params = [{transform_indices = @transform_0, window_bounds = array<i64: 48, 128>}, {transform_indices = @transform_1, window_bounds = array<i64: 128, 128>}, {transform_indices = @transform_2, window_bounds = array<i64: 1, 128>}, {transform_indices = @transform_3, window_bounds = array<i64: 1, 128>}, {transform_indices = @transform_4, window_bounds = array<i64: 48, 128>}]} {
    %c0_i32 = arith.constant 0 : i32
    %0 = arith.cmpi eq, %arg2, %c0_i32 : i32
    %1 = arith.extui %0 : i1 to i32
    %c0_i32_0 = arith.constant 0 : i32
    %2 = arith.cmpi ne, %1, %c0_i32_0 : i32
    scf.if %2 {
      %cst_10 = arith.constant 0.000000e+00 : f32
      %12 = vector.broadcast %cst_10 : f32 to vector<48x128xf32>
      %c0_11 = arith.constant 0 : index
      %c0_12 = arith.constant 0 : index
      %13 = vector.load %arg8[%c0_11, %c0_12] : memref<48x128xf32, #tpu.memory_space<vmem>>, vector<48x128xf32>
      tpu.vector_store %arg8[%c0_11, %c0_12], %12 {strides = array<i32>} : memref<48x128xf32, #tpu.memory_space<vmem>>, vector<48x128xf32>,
    } else {
    }
    %c0 = arith.constant 0 : index
    %c0_1 = arith.constant 0 : index
    %3 = vector.load %arg8[%c0, %c0_1] : memref<48x128xf32, #tpu.memory_space<vmem>>, vector<48x128xf32>
    %c0_2 = arith.constant 0 : index
    %c0_3 = arith.constant 0 : index
    %4 = vector.load %arg3[%c0_2, %c0_3] : memref<48x128xbf16, #tpu.memory_space<vmem>>, vector<48x128xbf16>
    %c0_4 = arith.constant 0 : index
    %c0_5 = arith.constant 0 : index
    %5 = vector.load %arg4[%c0_4, %c0_5] : memref<128x128xbf16, #tpu.memory_space<vmem>>, vector<128x128xbf16>
    %cst = arith.constant dense<0.000000e+00> : vector<48x128xf32>
    %6 = tpu.matmul %4, %5, %cst {dimension_numbers = #tpu.dot_dimension_numbers<[1], [0], [0], [1], [0, 0, 1, 1], [], []>} : vector<48x128xbf16>, vector<128x128xbf16>, vector<48x128xf32> -> vector<48x128xf32>
    %7 = arith.addf %3, %6 : vector<48x128xf32>
    %c0_6 = arith.constant 0 : index
    %c0_7 = arith.constant 0 : index
    %8 = vector.load %arg8[%c0_6, %c0_7] : memref<48x128xf32, #tpu.memory_space<vmem>>, vector<48x128xf32>
    tpu.vector_store %arg8[%c0_6, %c0_7], %7 {strides = array<i32>} : memref<48x128xf32, #tpu.memory_space<vmem>>, vector<48x128xf32>,
    %c0_i32_8 = arith.constant 0 : i32
    %9 = arith.cmpi eq, %arg2, %c0_i32_8 : i32
    %10 = arith.extui %9 : i1 to i32
    %c0_i32_9 = arith.constant 0 : i32
    %11 = arith.cmpi ne, %10, %c0_i32_9 : i32
    scf.if %11 {
      %c0_10 = arith.constant 0 : index
      %c0_11 = arith.constant 0 : index
      %12 = vector.load %arg8[%c0_10, %c0_11] : memref<48x128xf32, #tpu.memory_space<vmem>>, vector<48x128xf32>
      %c0_12 = arith.constant 0 : index
      %c0_13 = arith.constant 0 : index
      %13 = vector.load %arg5[%c0_12, %c0_13] : memref<1x128xf32, #tpu.memory_space<vmem>>, vector<1x128xf32>
      %14 = vector.broadcast %13 : vector<1x128xf32> to vector<48x128xf32>
      %15 = arith.mulf %12, %14 : vector<48x128xf32>
      %c0_14 = arith.constant 0 : index
      %c0_15 = arith.constant 0 : index
      %16 = vector.load %arg6[%c0_14, %c0_15] : memref<1x128xf32, #tpu.memory_space<vmem>>, vector<1x128xf32>
      %17 = vector.broadcast %16 : vector<1x128xf32> to vector<48x128xf32>
      %18 = arith.addf %15, %17 : vector<48x128xf32>
      %cst_16 = arith.constant 0.000000e+00 : f32
      %19 = vector.broadcast %cst_16 : f32 to vector<48x128xf32>
      %20 = arith.maximumf %18, %19 : vector<48x128xf32>
      %c0_17 = arith.constant 0 : index
      %c0_18 = arith.constant 0 : index
      %21 = vector.load %arg7[%c0_17, %c0_18] : memref<48x128xf32, #tpu.memory_space<vmem>>, vector<48x128xf32>
      tpu.vector_store %arg7[%c0_17, %c0_18], %20 {strides = array<i32>} : memref<48x128xf32, #tpu.memory_space<vmem>>, vector<48x128xf32>,
    } else {
    }
    return
  }
  func.func @transform_0(%arg0: i32, %arg1: i32, %arg2: i32) -> (i32, i32) {
    %c0_i32 = arith.constant 0 : i32
    return %arg0, %arg2 : i32, i32
  }
  func.func @transform_1(%arg0: i32, %arg1: i32, %arg2: i32) -> (i32, i32) {
    %c0_i32 = arith.constant 0 : i32
    return %arg2, %arg1 : i32, i32
  }
  func.func @transform_2(%arg0: i32, %arg1: i32, %arg2: i32) -> (i32, i32) {
    %c0_i32 = arith.constant 0 : i32
    %c0_i32_0 = arith.constant 0 : i32
    return %c0_i32, %arg1 : i32, i32
  }
  func.func @transform_3(%arg0: i32, %arg1: i32, %arg2: i32) -> (i32, i32) {
    %c0_i32 = arith.constant 0 : i32
    %c0_i32_0 = arith.constant 0 : i32
    return %c0_i32, %arg1 : i32, i32
  }
  func.func @transform_4(%arg0: i32, %arg1: i32, %arg2: i32) -> (i32, i32) {
    %c0_i32 = arith.constant 0 : i32
    return %arg0, %arg1 : i32, i32
  }
}

</mosaic_0001>

<llo_original>
// kernel: tpu_custom_call.1
$region0: #{tpu_custom_call.1}
  #allocation0 [shape = 'u32[]', space=smem, size = 0x4, offset = 0x4, fixed_abs, tag = 'smem constant byte address 0x4 - core index']
  #allocation1 [shape = 'u32[144,128]{1,0:T(1,128)}', space=vmem, size = 0x12000, scoped, tag = 'internal scratch']
  #allocation2 [shape = 'f32[48,128]{1,0:T(8,128)}', space=vmem, size = 0x6000, scoped, tag = 'scratch operand']
  %s0 = inlined_call_operand.hbm [shape: bf16[48,128], index: 0, kind: input, shape index: {}]
  %s1 = inlined_call_operand.hbm [shape: bf16[128,128], index: 1, kind: input, shape index: {}]
  %s2 = inlined_call_operand.vmem [shape: f32[1,128], index: 2, kind: input, shape index: {}]
  %s3 = inlined_call_operand.vmem [shape: f32[1,128], index: 3, kind: input, shape index: {}]
  %s4 = inlined_call_operand.hbm [shape: f32[48,128], index: 4, kind: output, shape index: {}]
  %s5 = sld [smem:[#allocation0]]
  $region42: #{tpu_custom_call.1} parent=0
    _
  %s7 = ssub.s32 1, %s5
  %s8 = scalar_select 0, %s7, %s5
  $region1: #{tpu_custom_call.1} parent=0
    #allocation3 [shape = 'u8[12288]{0}', space=vmem, size = 0x3000, scoped, tag = 'input window, operand 0, single buffered']
    #allocation4 [shape = 's32[1]{0}', space=sflag, size = 0x4, scoped, tag = 'scoped memory for tpu_custom_call.1']
    #allocation5 [shape = 's32[1]{0}', space=sflag, size = 0x4, scoped, tag = 'scoped memory for tpu_custom_call.1']
    #allocation6 [shape = 'u8[32768]{0}', space=vmem, size = 0x8000, scoped, tag = 'input window, operand 1, single buffered']
    #allocation7 [shape = 's32[1]{0}', space=sflag, size = 0x4, scoped, tag = 'scoped memory for tpu_custom_call.1']
    #allocation8 [shape = 'u8[24576]{0}', space=vmem, size = 0x6000, scoped, tag = 'output window, operand 0, single buffered']
    %9 = vsyncpa [#allocation4], 0
    %10 = vsyncpa [#allocation7], 0
    %11 = vsyncpa [#allocation5], 0
    // Predicated region
    $region2: #{tpu_custom_call.1} parent=1 // pred_check
      _
    $region3: #{tpu_custom_call.1} parent=1 // pred_check_branch
      %13 = sbr.rel (0) target = $region5
    $region4: #{tpu_custom_call.1} parent=1 // pred_region
      %s15 = ssub.s32 384, 384
      %16 = vsyncadd [#allocation4], %s15
      %s17 = sshll.u32 [#allocation3], 4
      %s18 = int_to_ptr.vmem [resolvable:$true] %s17
      %23 = dma.hbm_to_vmem [thread:$0]  %s0, 384, %s18, [#allocation4], 64, 64, 4
    $region5: #{tpu_custom_call.1} parent=1 // pred_fallthru
      _
    // Predicated region
    $region6: #{tpu_custom_call.1} parent=1 // pred_check
      _
    $region7: #{tpu_custom_call.1} parent=1 // pred_check_branch
      %25 = sbr.rel (0) target = $region9
    $region8: #{tpu_custom_call.1} parent=1 // pred_region
      %s27 = ssub.s32 1024, 1024
      %28 = vsyncadd [#allocation7], %s27
      %s29 = sshll.u32 [#allocation6], 4
      %s30 = int_to_ptr.vmem [resolvable:$true] %s29
      %35 = dma.hbm_to_vmem [thread:$0]  %s1, 1024, %s30, [#allocation7], 64, 64, 4
    $region9: #{tpu_custom_call.1} parent=1 // pred_fallthru
      _
    // Predicated region
    $region10: #{tpu_custom_call.1} parent=1 // pred_check
      _
    $region11: #{tpu_custom_call.1} parent=1 // pred_check_branch
      %37 = sbr.rel (0) target = $region13
    $region12: #{tpu_custom_call.1} parent=1 // pred_region
      _
    $region13: #{tpu_custom_call.1} parent=1 // pred_fallthru
      _
    // Predicated region
    $region14: #{tpu_custom_call.1} parent=1 // pred_check
      _
    $region15: #{tpu_custom_call.1} parent=1 // pred_check_branch
      %39 = sbr.rel (0) target = $region17
    $region16: #{tpu_custom_call.1} parent=1 // pred_region
      _
    $region17: #{tpu_custom_call.1} parent=1 // pred_fallthru
      _
    // Predicated region
    $region18: #{tpu_custom_call.1} parent=1 // pred_check
      _
    $region19: #{tpu_custom_call.1} parent=1 // pred_check_branch
      %41 = sbr.rel (0) target = $region21
    $region20: #{tpu_custom_call.1} parent=1 // pred_region
      %42 = dma.done [#allocation4], 384
    $region21: #{tpu_custom_call.1} parent=1 // pred_fallthru
      _
    // Predicated region
    $region22: #{tpu_custom_call.1} parent=1 // pred_check
      _
    $region23: #{tpu_custom_call.1} parent=1 // pred_check_branch
      %44 = sbr.rel (0) target = $region25
    $region24: #{tpu_custom_call.1} parent=1 // pred_region
      %45 = dma.done [#allocation7], 1024
    $region25: #{tpu_custom_call.1} parent=1 // pred_fallthru
      _
    %p47 = scmp.eq.s32.totalorder 0, 0
    // Predicated region
    $region26: #{tpu_custom_call.1} parent=1 // pred_check
      %p48 = pneg %p47
    $region27: #{tpu_custom_call.1} parent=1 // pred_check_branch
      %50 = sbr.rel (%p48) target = $region29
    $region28: #{tpu_custom_call.1} parent=1 // pred_region
      %51 = vst [vmem:[#allocation2] sm:$0xff] 0.0
      %52 = vst [vmem:[#allocation2 + $0x8] sm:$0xff] 0.0
      %53 = vst [vmem:[#allocation2 + $0x10] sm:$0xff] 0.0
      %54 = vst [vmem:[#allocation2 + $0x18] sm:$0xff] 0.0
      %55 = vst [vmem:[#allocation2 + $0x20] sm:$0xff] 0.0
      %56 = vst [vmem:[#allocation2 + $0x28] sm:$0xff] 0.0
    $region29: #{tpu_custom_call.1} parent=1 // pred_fallthru
      _
    %v57 = vld [vmem:[#allocation2] sm:$0xff]
    %v58 = vld [vmem:[#allocation2 + $0x8] sm:$0xff]
    %v59 = vld [vmem:[#allocation2 + $0x10] sm:$0xff]
    %v60 = vld [vmem:[#allocation2 + $0x18] sm:$0xff]
    %v61 = vld [vmem:[#allocation2 + $0x20] sm:$0xff]
    %v62 = vld [vmem:[#allocation2 + $0x28] sm:$0xff]
    %v63 = vld [vmem:[#allocation3] sm:$0xf]
    %v64 = vld [vmem:[#allocation3 + $0x4] sm:$0xf]
    %v65 = vld [vmem:[#allocation3 + $0x8] sm:$0xf]
    %v66 = vld [vmem:[#allocation3 + $0xc] sm:$0xf]
    %v67 = vld [vmem:[#allocation3 + $0x10] sm:$0xf]
    %v68 = vld [vmem:[#allocation3 + $0x14] sm:$0xf]
    %v69 = vld [vmem:[#allocation6] sm:$0xf]
    %v70 = vld [vmem:[#allocation6 + $0x4] sm:$0xf]
    %v71 = vld [vmem:[#allocation6 + $0x8] sm:$0xf]
    %v72 = vld [vmem:[#allocation6 + $0xc] sm:$0xf]
    %v73 = vld [vmem:[#allocation6 + $0x10] sm:$0xf]
    %v74 = vld [vmem:[#allocation6 + $0x14] sm:$0xf]
    %v75 = vld [vmem:[#allocation6 + $0x18] sm:$0xf]
    %v76 = vld [vmem:[#allocation6 + $0x1c] sm:$0xf]
    %v77 = vld [vmem:[#allocation6 + $0x20] sm:$0xf]
    %v78 = vld [vmem:[#allocation6 + $0x24] sm:$0xf]
    %v79 = vld [vmem:[#allocation6 + $0x28] sm:$0xf]
    %v80 = vld [vmem:[#allocation6 + $0x2c] sm:$0xf]
    %v81 = vld [vmem:[#allocation6 + $0x30] sm:$0xf]
    %v82 = vld [vmem:[#allocation6 + $0x34] sm:$0xf]
    %v83 = vld [vmem:[#allocation6 + $0x38] sm:$0xf]
    %v84 = vld [vmem:[#allocation6 + $0x3c] sm:$0xf]
    %v91 = vunpack.c.l.b16 %v63
    %v92 = vunpack.c.l.b16 %v64
    %v93 = vunpack.c.l.b16 %v65
    %v94 = vunpack.c.l.b16 %v66
    %v95 = vunpack.c.l.b16 %v67
    %v96 = vunpack.c.l.b16 %v68
    %v97 = vpack.c.b16 %v92, %v91
    %v98 = vpack.c.b16 %v94, %v93
    %v99 = vpack.c.b16 %v96, %v95
    %v119 = vunpack.c.l.b16 %v69
    %v120 = vunpack.c.l.b16 %v70
    %v121 = vunpack.c.l.b16 %v71
    %v122 = vunpack.c.l.b16 %v72
    %v123 = vunpack.c.l.b16 %v73
    %v124 = vunpack.c.l.b16 %v74
    %v125 = vunpack.c.l.b16 %v75
    %v126 = vunpack.c.l.b16 %v76
    %v127 = vunpack.c.l.b16 %v77
    %v128 = vunpack.c.l.b16 %v78
    %v129 = vunpack.c.l.b16 %v79
    %v130 = vunpack.c.l.b16 %v80
    %v131 = vunpack.c.l.b16 %v81
    %v132 = vunpack.c.l.b16 %v82
    %v133 = vunpack.c.l.b16 %v83
    %v134 = vunpack.c.l.b16 %v84
    %v135 = vpack.c.b16 %v120, %v119
    %v136 = vpack.c.b16 %v122, %v121
    %v137 = vpack.c.b16 %v124, %v123
    %v138 = vpack.c.b16 %v126, %v125
    %v139 = vpack.c.b16 %v128, %v127
    %v140 = vpack.c.b16 %v130, %v129
    %v141 = vpack.c.b16 %v132, %v131
    %v142 = vpack.c.b16 %v134, %v133
    %151 = vmatprep.subr.bf16.mxu0 0
    %152 = vmatpush1.bf16.msra.mxu0 %v135
    %153 = vmatprep.subr.bf16.mxu0 0
    %154 = vmatpush1.bf16.msra.mxu0 %v136
    %155 = vmatprep.subr.bf16.mxu0 0
    %156 = vmatpush1.bf16.msra.mxu0 %v137
    %157 = vmatprep.subr.bf16.mxu0 0
    %158 = vmatpush1.bf16.msra.mxu0 %v138
    %159 = vmatprep.subr.bf16.mxu0 0
    %160 = vmatpush1.bf16.msra.mxu0 %v139
    %161 = vmatprep.subr.bf16.mxu0 0
    %162 = vmatpush1.bf16.msra.mxu0 %v140
    %163 = vmatprep.subr.bf16.mxu0 0
    %164 = vmatpush1.bf16.msra.mxu0 %v141
    %165 = vmatprep.subr.bf16.mxu0 0
    %166 = vmatpush1.bf16.msra.mxu0 %v142
    %167 = vmatprep.subr.bf16.mxu0 0
    %168 = vmatpush1.bf16.msra.mxu0 0
    %169 = vmatprep.subr.bf16.mxu0 0
    %170 = vmatpush1.bf16.msra.mxu0 0
    %171 = vmatprep.subr.bf16.mxu0 0
    %172 = vmatpush1.bf16.msra.mxu0 0
    %173 = vmatprep.subr.bf16.mxu0 0
    %174 = vmatpush1.bf16.msra.mxu0 0
    %175 = vmatprep.subr.bf16.mxu0 0
    %176 = vmatpush1.bf16.msra.mxu0 0
    %177 = vmatprep.subr.bf16.mxu0 0
    %178 = vmatpush1.bf16.msra.mxu0 0
    %179 = vmatprep.subr.bf16.mxu0 0
    %180 = vmatpush1.bf16.msra.mxu0 0
    %181 = vmatprep.subr.bf16.mxu0 0
    %182 = vmatpush1.bf16.msra.mxu0 0
    %183 = vmatprep.mubr.bf16.mxu0 0
    %184 = vmatmul.mubr.bf16.gmra.mrb[0].mxu0 %v97
    %v185 = vpop.f32.mrb[0].mxu0
    %v186 = vadd.f32 0.0, %v185
    %v187 = vpop.f32.mrb[0].mxu0
    %v188 = vpop.f32.mrb[0].mxu0
    %v189 = vadd.f32 0.0, %v188
    %v190 = vpop.f32.mrb[0].mxu0
    %191 = vmatprep.mubr.bf16.mxu0 0
    %192 = vmatmul.mubr.bf16.gmra.mrb[0].mxu0 %v98
    %v193 = vpop.f32.mrb[0].mxu0
    %v194 = vadd.f32 0.0, %v193
    %v195 = vpop.f32.mrb[0].mxu0
    %v196 = vpop.f32.mrb[0].mxu0
    %v197 = vadd.f32 0.0, %v196
    %v198 = vpop.f32.mrb[0].mxu0
    %199 = vmatprep.mubr.bf16.mxu0 0
    %200 = vmatmul.mubr.bf16.gmra.mrb[0].mxu0 %v99
    %v201 = vpop.f32.mrb[0].mxu0
    %v202 = vadd.f32 0.0, %v201
    %v203 = vpop.f32.mrb[0].mxu0
    %v204 = vpop.f32.mrb[0].mxu0
    %v205 = vadd.f32 0.0, %v204
    %v206 = vpop.f32.mrb[0].mxu0
    %207 = vdwg.mxu0
    %v208 = vadd.f32 %v57, %v186
    %v209 = vadd.f32 %v58, %v189
    %v210 = vadd.f32 %v59, %v194
    %v211 = vadd.f32 %v60, %v197
    %v212 = vadd.f32 %v61, %v202
    %v213 = vadd.f32 %v62, %v205
    %214 = vst [vmem:[#allocation2] sm:$0xff] %v208
    %215 = vst [vmem:[#allocation2 + $0x8] sm:$0xff] %v209
    %216 = vst [vmem:[#allocation2 + $0x10] sm:$0xff] %v210
    %217 = vst [vmem:[#allocation2 + $0x18] sm:$0xff] %v211
    %218 = vst [vmem:[#allocation2 + $0x20] sm:$0xff] %v212
    %219 = vst [vmem:[#allocation2 + $0x28] sm:$0xff] %v213
    // Predicated region
    $region30: #{tpu_custom_call.1} parent=1 // pred_check
      %p220 = pneg %p47
    $region31: #{tpu_custom_call.1} parent=1 // pred_check_branch
      %222 = sbr.rel (%p220) target = $region33
    $region32: #{tpu_custom_call.1} parent=1 // pred_region
      %v223 = vld [vmem:[#allocation2] sm:$0xff]
      %v224 = vld [vmem:[#allocation2 + $0x8] sm:$0xff]
      %v225 = vld [vmem:[#allocation2 + $0x10] sm:$0xff]
      %v226 = vld [vmem:[#allocation2 + $0x18] sm:$0xff]
      %v227 = vld [vmem:[#allocation2 + $0x20] sm:$0xff]
      %v228 = vld [vmem:[#allocation2 + $0x28] sm:$0xff]
      %v229 = vld [vmem:[%s2] sm:$0x1]
      %v231 = vlaneseq
      %v232 = vshrl.u32 %v231, 7
      %v233 = vsub.s32 0, %v232
      %v234 = vrot.slane %v229, %v233
      %v236 = vmul.f32 %v223, %v234
      %v237 = vmul.f32 %v224, %v234
      %v238 = vmul.f32 %v225, %v234
      %v239 = vmul.f32 %v226, %v234
      %v240 = vmul.f32 %v227, %v234
      %v241 = vmul.f32 %v228, %v234
      %v242 = vld [vmem:[%s3] sm:$0x1]
      %v244 = vlaneseq
      %v245 = vshrl.u32 %v244, 7
      %v246 = vsub.s32 0, %v245
      %v247 = vrot.slane %v242, %v246
      %v249 = vadd.f32 %v236, %v247
      %v250 = vadd.f32 %v237, %v247
      %v251 = vadd.f32 %v238, %v247
      %v252 = vadd.f32 %v239, %v247
      %v253 = vadd.f32 %v240, %v247
      %v254 = vadd.f32 %v241, %v247
      %v255 = vmax.f32 %v249, 0.0
      %v256 = vmax.f32 %v250, 0.0
      %v257 = vmax.f32 %v251, 0.0
      %v258 = vmax.f32 %v252, 0.0
      %v259 = vmax.f32 %v253, 0.0
      %v260 = vmax.f32 %v254, 0.0
      %261 = vst [vmem:[#allocation8] sm:$0xff] %v255
      %262 = vst [vmem:[#allocation8 + $0x8] sm:$0xff] %v256
      %263 = vst [vmem:[#allocation8 + $0x10] sm:$0xff] %v257
      %264 = vst [vmem:[#allocation8 + $0x18] sm:$0xff] %v258
      %265 = vst [vmem:[#allocation8 + $0x20] sm:$0xff] %v259
      %266 = vst [vmem:[#allocation8 + $0x28] sm:$0xff] %v260
    $region33: #{tpu_custom_call.1} parent=1 // pred_fallthru
      _
    // Predicated region
    $region34: #{tpu_custom_call.1} parent=1 // pred_check
      _
    $region35: #{tpu_custom_call.1} parent=1 // pred_check_branch
      %268 = sbr.rel (0) target = $region37
    $region36: #{tpu_custom_call.1} parent=1 // pred_region
      %s270 = ssub.s32 768, 768
      %271 = vsyncadd [#allocation5], %s270
      %s272 = sshll.u32 [#allocation8], 4
      %s273 = int_to_ptr.vmem [resolvable:$true] %s272
      %278 = dma.vmem_to_hbm [thread:$0]  %s273, 768, %s4, [#allocation5], 128, 128, 8
    $region37: #{tpu_custom_call.1} parent=1 // pred_fallthru
      _
    // Predicated region
    $region38: #{tpu_custom_call.1} parent=1 // pred_check
      _
    $region39: #{tpu_custom_call.1} parent=1 // pred_check_branch
      %280 = sbr.rel (0) target = $region41
    $region40: #{tpu_custom_call.1} parent=1 // pred_region
      %281 = dma.done [#allocation5], 768
    $region41: #{tpu_custom_call.1} parent=1 // pred_fallthru
      _
    %282 = vsyncpa [#allocation4], 1
    %283 = vsyncpa [#allocation7], 1
    %284 = vsyncpa [#allocation5], 1

</llo_original>
